<compile_context>
chip_gen: v5e
topology: v5e:2x2
jax: 0.10.0
libtpu: 0.0.40
codegen_flags: <defaults>
</compile_context>

<pallas_src>
import functools

import jax
import jax.numpy as jnp
from jax import lax
from jax.experimental import pallas as pl
from jax.experimental.pallas import tpu as pltpu


def _fused_layers_kernel(m_ref, x0_ref, w_ref, b_ref, out_ref):
    """All HypergraphConv layers fused; out_ref is the resident activation.

    out <- relu( M @ (out @ W_l) + b_l )   for layer l = 0 .. L-1
    """
    layer = pl.program_id(0)

    @pl.when(layer == 0)
    def _():
        out_ref[...] = x0_ref[...]            # seed the resident accumulator

    act = out_ref[...].astype(jnp.bfloat16)   # bf16 MXU operand (f32 master copy)
    w = w_ref[0]                              # [Fp, Fp] bf16 (this layer's weight)
    b = b_ref[0]                              # [1, Fp]  f32  (this layer's bias)

    # x' = X W  then  node = M x'  -- two bf16 x bf16 MXU matmuls, f32 accumulation.
    xw = jnp.dot(act, w, preferred_element_type=jnp.float32)               # [Np, Fp]
    node = jnp.dot(m_ref[...], xw.astype(jnp.bfloat16),
                   preferred_element_type=jnp.float32)                     # [Np, Fp]

    # bias add + (Identity norm) + ReLU, written back into the resident output.
    out_ref[...] = jnp.maximum(node + b, 0.0)


def _round_up(v, m):
    return ((v + m - 1) // m) * m


def _make_specs(n_pad, f_pad, single_buffer_constants):
    """BlockSpecs; constant blocks optionally single-buffered (VMEM headroom)."""
    if single_buffer_constants:
        const_kw = dict(pipeline_mode=pl.Buffered(1))
    else:
        const_kw = {}
    in_specs = [
        # Constant index_maps: DMA'd once, resident across all layers.
        pl.BlockSpec((n_pad, n_pad), lambda l: (0, 0), **const_kw),        # M (bf16)
        pl.BlockSpec((n_pad, f_pad), lambda l: (0, 0), **const_kw),        # X0 (f32)
        # Per-layer weight / bias blocks stream through the pipeline.
        pl.BlockSpec((1, f_pad, f_pad), lambda l: (l, 0, 0)),              # W_l (bf16)
        pl.BlockSpec((1, 1, f_pad), lambda l: (l, 0, 0)),                  # b_l (f32)
    ]
    out_spec = pl.BlockSpec((n_pad, f_pad), lambda l: (0, 0), **const_kw)  # resident
    return in_specs, out_spec


def hyper_conv_nn_forward(x, hyperedge_index, params, num_hyperedges):
    """Forward pass of HyperConvNN (use_attention=False, heads=1, norm=None)."""
    n_nodes, f_in = x.shape
    f_hidden = params[0][0].shape[1]
    num_layers = len(params)

    # --- One-time glue (constant across layers): densify the sparse incidence
    # (duplicates accumulate, matching PyG's scatter-sum) and fold the degree
    # scalings + transpose into the propagation matrix M = D^-1 H B^-1 H^T.
    h = jnp.zeros((n_nodes, num_hyperedges), jnp.float32)
    h = h.at[hyperedge_index[0], hyperedge_index[1]].add(1.0)
    deg_n = h.sum(axis=1, keepdims=True)                      # [N, 1]
    deg_e = h.sum(axis=0, keepdims=True)                      # [1, E]
    d_inv = jnp.where(deg_n > 0, 1.0 / deg_n, 0.0)
    b_inv = jnp.where(deg_e > 0, 1.0 / deg_e, 0.0)
    m = jnp.dot(d_inv * h, (b_inv * h).T,
                precision=lax.Precision.HIGHEST)              # [N, N], one-time

    # --- Pad to MXU-friendly shapes: features AND nodes padded to 128 so both
    # contractions are full-width, lane-dense MXU tiles.  Zero padding is
    # exact: padded feature cols stay 0 (zero W cols / zero b), padded node
    # rows never feed real rows (zero M rows/cols) and are sliced off.
    f_pad = _round_up(max(f_in, f_hidden), 128)
    n_pad = _round_up(n_nodes, 128)

    x_p = jnp.zeros((n_pad, f_pad), jnp.float32).at[:n_nodes, :f_in].set(x)
    m_p = (jnp.zeros((n_pad, n_pad), jnp.float32)
           .at[:n_nodes, :n_nodes].set(m)).astype(jnp.bfloat16)

    w_stack = jnp.zeros((num_layers, f_pad, f_pad), jnp.float32)
    b_stack = jnp.zeros((num_layers, 1, f_pad), jnp.float32)
    for i, (w, b) in enumerate(params):
        w_stack = w_stack.at[i, : w.shape[0], : w.shape[1]].set(w)
        b_stack = b_stack.at[i, :, : b.shape[1]].set(b)
    w_stack = w_stack.astype(jnp.bfloat16)

    # --- Explicit VMEM budget (worst case: everything double-buffered) plus
    # headroom for the compiler-internal xw / relu intermediates.
    budget = (2 * n_pad * n_pad * 2            # M (bf16)
              + 2 * n_pad * f_pad * 4          # X0 (f32)
              + 2 * n_pad * f_pad * 4          # out (f32)
              + 2 * f_pad * f_pad * 2          # W_l (bf16), double-buffered
              + 2 * f_pad * 4                  # b_l (f32)
              + 2 * n_pad * f_pad * 4)         # xw / elementwise intermediates
    vmem_limit = int(min(max(budget + (4 << 20), 32 << 20), 64 << 20))

    compiler_params = pltpu.CompilerParams(
        dimension_semantics=("arbitrary",),    # layers are strictly sequential
        vmem_limit_bytes=vmem_limit,
    )
    out_shape = jax.ShapeDtypeStruct((n_pad, f_pad), jnp.float32)

    # Prefer single-buffering the constant blocks; gracefully fall back to the
    # default pipeline if this jax build rejects pipeline_mode on BlockSpecs.
    out = None
    last_err = None
    for single_buf in (True, False):
        in_specs, out_spec = _make_specs(n_pad, f_pad, single_buf)
        try:
            out = pl.pallas_call(
                _fused_layers_kernel,
                out_shape=out_shape,
                grid_spec=pltpu.PrefetchScalarGridSpec(
                    num_scalar_prefetch=0,
                    grid=(num_layers,),
                    in_specs=in_specs,
                    out_specs=out_spec,
                ),
                compiler_params=compiler_params,
            )(m_p, x_p, w_stack, b_stack)
            out = jax.block_until_ready(out)
            break
        except Exception as e:  # noqa: BLE001 - fallback path, see comment above
            last_err = e
            out = None
    if out is None:
        raise last_err

    return out[:n_nodes, :f_hidden]


def init_params(key, in_channels, hidden_channels, num_layers):
    """Deterministic glorot-uniform weights, zero biases (matches PyG init)."""
    params = []
    fan_in = in_channels
    for _ in range(num_layers):
        key, sub = jax.random.split(key)
        fan_out = hidden_channels
        limit = jnp.sqrt(6.0 / (fan_in + fan_out))
        w = jax.random.uniform(sub, (fan_in, fan_out), jnp.float32,
                               minval=-limit, maxval=limit)
        b = jnp.zeros((1, fan_out), jnp.float32)
        params.append((w, b))
        fan_in = hidden_channels
    return params


def _reference_forward(x, hyperedge_index, params, num_hyperedges):
    """Pure-JAX reference (per-layer PyG formulation) for correctness checking."""
    n_nodes = x.shape[0]
    h = jnp.zeros((n_nodes, num_hyperedges), jnp.float32)
    h = h.at[hyperedge_index[0], hyperedge_index[1]].add(1.0)
    deg_n = h.sum(axis=1, keepdims=True)
    deg_e = h.sum(axis=0, keepdims=True).T
    d_inv = jnp.where(deg_n > 0, 1.0 / deg_n, 0.0)
    b_inv = jnp.where(deg_e > 0, 1.0 / deg_e, 0.0)
    dot = functools.partial(jnp.dot, precision=lax.Precision.HIGHEST)
    for (w, b) in params:
        xw = dot(x, w)
        edge = dot(h.T, xw) * b_inv
        node = dot(h, edge) * d_inv + b
        x = jnp.maximum(node, 0.0)
    return x


if __name__ == "__main__":
    # Small shapes consistent with the module's forward:
    #   x: [num_nodes, in_channels], hyperedge_index: [2, num_incidences]
    NUM_NODES = 32
    IN_CHANNELS = 16
    HIDDEN_CHANNELS = 32
    NUM_LAYERS = 2
    NUM_HYPEREDGES = 8
    NUM_INCIDENCES = 64

    key = jax.random.PRNGKey(0)
    k_x, k_n, k_p = jax.random.split(key, 3)

    x = jax.random.normal(k_x, (NUM_NODES, IN_CHANNELS), jnp.float32)
    node_ids = jax.random.randint(k_n, (NUM_INCIDENCES,), 0, NUM_NODES)
    # Ensure every hyperedge id 0..E-1 appears (so num_edges is well defined).
    edge_ids = jnp.arange(NUM_INCIDENCES, dtype=jnp.int32) % NUM_HYPEREDGES
    hyperedge_index = jnp.stack([node_ids, edge_ids], axis=0)  # [2, num_inc]

    params = init_params(k_p, IN_CHANNELS, HIDDEN_CHANNELS, NUM_LAYERS)

    out = hyper_conv_nn_forward(x, hyperedge_index, params, NUM_HYPEREDGES)
    out = jax.block_until_ready(out)

    ref = _reference_forward(x, hyperedge_index, params, NUM_HYPEREDGES)
    assert out.shape == (NUM_NODES, HIDDEN_CHANNELS)
    # bf16 MXU operands (f32 accumulation) across 2 fused layers plus the
    # M = D^-1 H B^-1 H^T reassociation: check max error against output scale.
    err = float(jnp.max(jnp.abs(out - ref)))
    scale = float(jnp.maximum(jnp.max(jnp.abs(ref)), 1.0))
    assert err <= 5e-2 * scale, f"max abs err {err} vs output scale {scale}"

    print("KERNEL_OK")
</pallas_src>

<mosaic_0001>
module attributes {stable_mosaic.version = 11 : i64} {
  func.func @_fused_layers_kernel(%arg0: i32, %arg1: memref<128x128xbf16, #tpu.memory_space<vmem>>, %arg2: memref<128x128xf32, #tpu.memory_space<vmem>>, %arg3: memref<1x128x128xbf16, #tpu.memory_space<vmem>>, %arg4: memref<1x1x128xf32, #tpu.memory_space<vmem>>, %arg5: memref<128x128xf32, #tpu.memory_space<vmem>>) attributes {dimension_semantics = [#tpu.dimension_semantics<arbitrary>], iteration_bounds = array<i64: 2>, scalar_prefetch = 0 : i64, scratch_operands = 0 : i64, tpu.core_type = #tpu.core_type<tc>, window_params = [{pipeline_mode = #tpu.pipeline_mode<synchronous>, transform_indices = @transform_0, window_bounds = array<i64: 128, 128>}, {pipeline_mode = #tpu.pipeline_mode<synchronous>, transform_indices = @transform_1, window_bounds = array<i64: 128, 128>}, {transform_indices = @transform_2, window_bounds = array<i64: 1, 128, 128>}, {transform_indices = @transform_3, window_bounds = array<i64: 1, 1, 128>}, {pipeline_mode = #tpu.pipeline_mode<synchronous>, transform_indices = @transform_4, window_bounds = array<i64: 128, 128>}]} {
    %c0_i32 = arith.constant 0 : i32
    %0 = arith.cmpi eq, %arg0, %c0_i32 : i32
    %1 = arith.extui %0 : i1 to i32
    %c0_i32_0 = arith.constant 0 : i32
    %2 = arith.cmpi ne, %1, %c0_i32_0 : i32
    scf.if %2 {
      %c0_14 = arith.constant 0 : index
      %c0_15 = arith.constant 0 : index
      %18 = vector.load %arg2[%c0_14, %c0_15] : memref<128x128xf32, #tpu.memory_space<vmem>>, vector<128x128xf32>
      %c0_16 = arith.constant 0 : index
      %c0_17 = arith.constant 0 : index
      %19 = vector.load %arg5[%c0_16, %c0_17] : memref<128x128xf32, #tpu.memory_space<vmem>>, vector<128x128xf32>
      tpu.vector_store %arg5[%c0_16, %c0_17], %18 {strides = array<i32>} : memref<128x128xf32, #tpu.memory_space<vmem>>, vector<128x128xf32>,
    } else {
    }
    %c0 = arith.constant 0 : index
    %c0_1 = arith.constant 0 : index
    %3 = vector.load %arg5[%c0, %c0_1] : memref<128x128xf32, #tpu.memory_space<vmem>>, vector<128x128xf32>
    %4 = arith.truncf %3 : vector<128x128xf32> to vector<128x128xbf16>
    %c0_2 = arith.constant 0 : index
    %c0_3 = arith.constant 0 : index
    %c0_4 = arith.constant 0 : index
    %5 = vector.load %arg3[%c0_2, %c0_3, %c0_4] : memref<1x128x128xbf16, #tpu.memory_space<vmem>>, vector<1x128x128xbf16>
    %6 = vector.shape_cast %5 : vector<1x128x128xbf16> to vector<128x128xbf16>
    %c0_5 = arith.constant 0 : index
    %c0_6 = arith.constant 0 : index
    %c0_7 = arith.constant 0 : index
    %7 = vector.load %arg4[%c0_5, %c0_6, %c0_7] : memref<1x1x128xf32, #tpu.memory_space<vmem>>, vector<1x1x128xf32>
    %8 = vector.shape_cast %7 : vector<1x1x128xf32> to vector<1x128xf32>
    %cst = arith.constant dense<0.000000e+00> : vector<128x128xf32>
    %9 = tpu.matmul %4, %6, %cst {dimension_numbers = #tpu.dot_dimension_numbers<[1], [0], [0], [1], [0, 0, 1, 1], [], []>} : vector<128x128xbf16>, vector<128x128xbf16>, vector<128x128xf32> -> vector<128x128xf32>
    %c0_8 = arith.constant 0 : index
    %c0_9 = arith.constant 0 : index
    %10 = vector.load %arg1[%c0_8, %c0_9] : memref<128x128xbf16, #tpu.memory_space<vmem>>, vector<128x128xbf16>
    %11 = arith.truncf %9 : vector<128x128xf32> to vector<128x128xbf16>
    %cst_10 = arith.constant dense<0.000000e+00> : vector<128x128xf32>
    %12 = tpu.matmul %10, %11, %cst_10 {dimension_numbers = #tpu.dot_dimension_numbers<[1], [0], [0], [1], [0, 0, 1, 1], [], []>} : vector<128x128xbf16>, vector<128x128xbf16>, vector<128x128xf32> -> vector<128x128xf32>
    %13 = vector.broadcast %8 : vector<1x128xf32> to vector<128x128xf32>
    %14 = arith.addf %12, %13 : vector<128x128xf32>
    %cst_11 = arith.constant 0.000000e+00 : f32
    %15 = vector.broadcast %cst_11 : f32 to vector<128x128xf32>
    %16 = arith.maximumf %14, %15 : vector<128x128xf32>
    %c0_12 = arith.constant 0 : index
    %c0_13 = arith.constant 0 : index
    %17 = vector.load %arg5[%c0_12, %c0_13] : memref<128x128xf32, #tpu.memory_space<vmem>>, vector<128x128xf32>
    tpu.vector_store %arg5[%c0_12, %c0_13], %16 {strides = array<i32>} : memref<128x128xf32, #tpu.memory_space<vmem>>, vector<128x128xf32>,
    return
  }
  func.func @transform_0(%arg0: i32) -> (i32, i32) {
    %c0_i32 = arith.constant 0 : i32
    %c0_i32_0 = arith.constant 0 : i32
    %c0_i32_1 = arith.constant 0 : i32
    return %c0_i32, %c0_i32_0 : i32, i32
  }
  func.func @transform_1(%arg0: i32) -> (i32, i32) {
    %c0_i32 = arith.constant 0 : i32
    %c0_i32_0 = arith.constant 0 : i32
    %c0_i32_1 = arith.constant 0 : i32
    return %c0_i32, %c0_i32_0 : i32, i32
  }
  func.func @transform_2(%arg0: i32) -> (i32, i32, i32) {
    %c0_i32 = arith.constant 0 : i32
    %c0_i32_0 = arith.constant 0 : i32
    %c0_i32_1 = arith.constant 0 : i32
    return %arg0, %c0_i32, %c0_i32_0 : i32, i32, i32
  }
  func.func @transform_3(%arg0: i32) -> (i32, i32, i32) {
    %c0_i32 = arith.constant 0 : i32
    %c0_i32_0 = arith.constant 0 : i32
    %c0_i32_1 = arith.constant 0 : i32
    return %arg0, %c0_i32, %c0_i32_0 : i32, i32, i32
  }
  func.func @transform_4(%arg0: i32) -> (i32, i32) {
    %c0_i32 = arith.constant 0 : i32
    %c0_i32_0 = arith.constant 0 : i32
    %c0_i32_1 = arith.constant 0 : i32
    return %c0_i32, %c0_i32_0 : i32, i32
  }
}

module attributes {stable_mosaic.version = 11 : i64} {
  func.func @_fused_layers_kernel(%arg0: i32, %arg1: memref<128x128xbf16, #tpu.memory_space<vmem>>, %arg2: memref<128x128xf32, #tpu.memory_space<vmem>>, %arg3: memref<1x128x128xbf16, #tpu.memory_space<vmem>>, %arg4: memref<1x1x128xf32, #tpu.memory_space<vmem>>, %arg5: memref<128x128xf32, #tpu.memory_space<vmem>>) attributes {dimension_semantics = [#tpu.dimension_semantics<arbitrary>], iteration_bounds = array<i64: 2>, scalar_prefetch = 0 : i64, scratch_operands = 0 : i64, tpu.core_type = #tpu.core_type<tc>, window_params = [{pipeline_mode = #tpu.pipeline_mode<synchronous>, transform_indices = @transform_0, window_bounds = array<i64: 128, 128>}, {pipeline_mode = #tpu.pipeline_mode<synchronous>, transform_indices = @transform_1, window_bounds = array<i64: 128, 128>}, {transform_indices = @transform_2, window_bounds = array<i64: 1, 128, 128>}, {transform_indices = @transform_3, window_bounds = array<i64: 1, 1, 128>}, {pipeline_mode = #tpu.pipeline_mode<synchronous>, transform_indices = @transform_4, window_bounds = array<i64: 128, 128>}]} {
    %c0_i32 = arith.constant 0 : i32
    %0 = arith.cmpi eq, %arg0, %c0_i32 : i32
    %1 = arith.extui %0 : i1 to i32
    %c0_i32_0 = arith.constant 0 : i32
    %2 = arith.cmpi ne, %1, %c0_i32_0 : i32
    scf.if %2 {
      %c0_14 = arith.constant 0 : index
      %c0_15 = arith.constant 0 : index
      %18 = vector.load %arg2[%c0_14, %c0_15] : memref<128x128xf32, #tpu.memory_space<vmem>>, vector<128x128xf32>
      %c0_16 = arith.constant 0 : index
      %c0_17 = arith.constant 0 : index
      %19 = vector.load %arg5[%c0_16, %c0_17] : memref<128x128xf32, #tpu.memory_space<vmem>>, vector<128x128xf32>
      tpu.vector_store %arg5[%c0_16, %c0_17], %18 {strides = array<i32>} : memref<128x128xf32, #tpu.memory_space<vmem>>, vector<128x128xf32>,
    } else {
    }
    %c0 = arith.constant 0 : index
    %c0_1 = arith.constant 0 : index
    %3 = vector.load %arg5[%c0, %c0_1] : memref<128x128xf32, #tpu.memory_space<vmem>>, vector<128x128xf32>
    %4 = arith.truncf %3 : vector<128x128xf32> to vector<128x128xbf16>
    %c0_2 = arith.constant 0 : index
    %c0_3 = arith.constant 0 : index
    %c0_4 = arith.constant 0 : index
    %5 = vector.load %arg3[%c0_2, %c0_3, %c0_4] : memref<1x128x128xbf16, #tpu.memory_space<vmem>>, vector<1x128x128xbf16>
    %6 = vector.shape_cast %5 : vector<1x128x128xbf16> to vector<128x128xbf16>
    %c0_5 = arith.constant 0 : index
    %c0_6 = arith.constant 0 : index
    %c0_7 = arith.constant 0 : index
    %7 = vector.load %arg4[%c0_5, %c0_6, %c0_7] : memref<1x1x128xf32, #tpu.memory_space<vmem>>, vector<1x1x128xf32>
    %8 = vector.shape_cast %7 : vector<1x1x128xf32> to vector<1x128xf32>
    %cst = arith.constant dense<0.000000e+00> : vector<128x128xf32>
    %9 = tpu.matmul %4, %6, %cst {dimension_numbers = #tpu.dot_dimension_numbers<[1], [0], [0], [1], [0, 0, 1, 1], [], []>} : vector<128x128xbf16>, vector<128x128xbf16>, vector<128x128xf32> -> vector<128x128xf32>
    %c0_8 = arith.constant 0 : index
    %c0_9 = arith.constant 0 : index
    %10 = vector.load %arg1[%c0_8, %c0_9] : memref<128x128xbf16, #tpu.memory_space<vmem>>, vector<128x128xbf16>
    %11 = arith.truncf %9 : vector<128x128xf32> to vector<128x128xbf16>
    %cst_10 = arith.constant dense<0.000000e+00> : vector<128x128xf32>
    %12 = tpu.matmul %10, %11, %cst_10 {dimension_numbers = #tpu.dot_dimension_numbers<[1], [0], [0], [1], [0, 0, 1, 1], [], []>} : vector<128x128xbf16>, vector<128x128xbf16>, vector<128x128xf32> -> vector<128x128xf32>
    %13 = vector.broadcast %8 : vector<1x128xf32> to vector<128x128xf32>
    %14 = arith.addf %12, %13 : vector<128x128xf32>
    %cst_11 = arith.constant 0.000000e+00 : f32
    %15 = vector.broadcast %cst_11 : f32 to vector<128x128xf32>
    %16 = arith.maximumf %14, %15 : vector<128x128xf32>
    %c0_12 = arith.constant 0 : index
    %c0_13 = arith.constant 0 : index
    %17 = vector.load %arg5[%c0_12, %c0_13] : memref<128x128xf32, #tpu.memory_space<vmem>>, vector<128x128xf32>
    tpu.vector_store %arg5[%c0_12, %c0_13], %16 {strides = array<i32>} : memref<128x128xf32, #tpu.memory_space<vmem>>, vector<128x128xf32>,
    return
  }
  func.func @transform_0(%arg0: i32) -> (i32, i32) {
    %c0_i32 = arith.constant 0 : i32
    %c0_i32_0 = arith.constant 0 : i32
    %c0_i32_1 = arith.constant 0 : i32
    return %c0_i32, %c0_i32_0 : i32, i32
  }
  func.func @transform_1(%arg0: i32) -> (i32, i32) {
    %c0_i32 = arith.constant 0 : i32
    %c0_i32_0 = arith.constant 0 : i32
    %c0_i32_1 = arith.constant 0 : i32
    return %c0_i32, %c0_i32_0 : i32, i32
  }
  func.func @transform_2(%arg0: i32) -> (i32, i32, i32) {
    %c0_i32 = arith.constant 0 : i32
    %c0_i32_0 = arith.constant 0 : i32
    %c0_i32_1 = arith.constant 0 : i32
    return %arg0, %c0_i32, %c0_i32_0 : i32, i32, i32
  }
  func.func @transform_3(%arg0: i32) -> (i32, i32, i32) {
    %c0_i32 = arith.constant 0 : i32
    %c0_i32_0 = arith.constant 0 : i32
    %c0_i32_1 = arith.constant 0 : i32
    return %arg0, %c0_i32, %c0_i32_0 : i32, i32, i32
  }
  func.func @transform_4(%arg0: i32) -> (i32, i32) {
    %c0_i32 = arith.constant 0 : i32
    %c0_i32_0 = arith.constant 0 : i32
    %c0_i32_1 = arith.constant 0 : i32
    return %c0_i32, %c0_i32_0 : i32, i32
  }
}

</mosaic_0001>

<llo_original>
// kernel: tpu_custom_call.1
$region0: #{tpu_custom_call.1}
  #allocation0 [shape = 'u32[]', space=smem, size = 0x4, offset = 0x4, fixed_abs, tag = 'smem constant byte address 0x4 - core index']
  #allocation1 [shape = 'u32[72,128]{1,0:T(1,128)}', space=vmem, size = 0x9000, scoped, tag = 'internal scratch']
  %s0 = inlined_call_operand.hbm [shape: bf16[128,128], index: 0, kind: input, shape index: {}]
  %s1 = inlined_call_operand.hbm [shape: f32[128,128], index: 1, kind: input, shape index: {}]
  %s2 = inlined_call_operand.hbm [shape: bf16[2,128,128], index: 2, kind: input, shape index: {}]
  %s3 = inlined_call_operand.vmem [shape: f32[2,1,128], index: 3, kind: input, shape index: {}]
  %s4 = inlined_call_operand.hbm [shape: f32[128,128], index: 4, kind: output, shape index: {}]
  %s5 = sld [smem:[#allocation0]]
  $region65: #{tpu_custom_call.1} parent=0
    _
  %s7 = ssub.s32 1, %s5
  %s8 = scalar_select 0, %s7, %s5
  $region1: #{tpu_custom_call.1} parent=0
    #allocation2 [shape = 'u8[32768]{0}', space=vmem, size = 0x8000, scoped, tag = 'input window, operand 0, single buffered']
    #allocation3 [shape = 's32[2]{0}', space=sflag, size = 0x8, scoped, tag = 'scoped memory for tpu_custom_call.1']
    #allocation4 [shape = 's32[2]{0}', space=sflag, size = 0x8, scoped, tag = 'scoped memory for tpu_custom_call.1']
    #allocation5 [shape = 'u8[65536]{0}', space=vmem, size = 0x10000, scoped, tag = 'input window, operand 1, single buffered']
    #allocation6 [shape = 's32[1]{0}', space=sflag, size = 0x4, scoped, tag = 'scoped memory for tpu_custom_call.1']
    #allocation7 [shape = 'u8[65536]{0}', space=vmem, size = 0x10000, scoped, tag = 'input window, operand 2']
    #allocation8 [shape = 'u8[65536]{0}', space=vmem, size = 0x10000, scoped, tag = 'output window, operand 0, single buffered']
    %9 = vsyncpa [#allocation3], 0
    %10 = vsyncpa [#allocation6], 0
    %11 = vsyncpa [#allocation4], 0
    loop: start=0, step=1, limit=4
    $region2: #{tpu_custom_call.1} parent=1 // loop_pre_header
      _
    $region3: #{tpu_custom_call.1} parent=1 // loop_header
      %s13 = sphi 0, %s17
      %p14 = scmp.ge.s32.totalorder %s13, 4
      %s21 = sphi 0, %s21
      %s23 = sphi 0, %s21
      %s24 = sphi 0, %s23
      %s38 = sphi 0, %s24
      %s42 = sphi 0, %s42
      %s44 = sphi 0, %s42
      %s45 = sphi 0, %s44
      %s59 = sphi 0, %s45
      %s65 = sphi 0, %s67
      %s68 = sphi 0, %s65
      %s69 = sphi 0, %s68
      %s85 = sphi 0, %s69
      %s91 = sphi 0, %s93
      %s94 = sphi 0, %s91
      %s95 = sphi 0, %s94
      %s111 = sphi 0, %s95
      %s115 = sphi 0, %s115
      %s117 = sphi 0, %s115
      %s118 = sphi 0, %s117
      %s132 = sphi 0, %s118
    $region4: #{tpu_custom_call.1} parent=1 // loop_header_branch
      %16 = sbr.rel (%p14) target = $region8
    $region5: #{tpu_custom_call.1} parent=1 // loop_body
      %s18 = ssub.s32 %s13, 1
      %s19 = ssub.s32 %s13, 2
      %s20 = sadd.s32 %s13, 1
      %s22 = sadd.s32 %s21, 1
      %p25 = scmp.eq.s32.totalorder %s13, 1
      %p26 = scmp.ne.s32.totalorder %s21, %s23
      %p27 = scmp.eq.s32.totalorder %s13, 0
      %p28 = por %p26, %p27
      %p29 = scmp.ne.s32.totalorder %s21, %s23
      %p30 = scmp.eq.s32.totalorder %s18, 1
      %p31 = por %p29, %p30
      %p32 = scmp.ne.s32.totalorder %s23, %s24
      %p33 = scmp.eq.s32.totalorder %s18, 0
      %p34 = por %p32, %p33
      %p35 = scmp.ne.s32.totalorder %s23, %s24
      %p36 = scmp.eq.s32.totalorder %s19, 1
      %p37 = por %p35, %p36
      %p39 = scmp.ne.s32.totalorder %s24, %s38
      %p40 = scmp.eq.s32.totalorder %s19, 0
      %p41 = por %p39, %p40
      %s43 = sadd.s32 %s42, 1
      %p46 = scmp.eq.s32.totalorder %s13, 1
      %p47 = scmp.ne.s32.totalorder %s42, %s44
      %p48 = scmp.eq.s32.totalorder %s13, 0
      %p49 = por %p47, %p48
      %p50 = scmp.ne.s32.totalorder %s42, %s44
      %p51 = scmp.eq.s32.totalorder %s18, 1
      %p52 = por %p50, %p51
      %p53 = scmp.ne.s32.totalorder %s44, %s45
      %p54 = scmp.eq.s32.totalorder %s18, 0
      %p55 = por %p53, %p54
      %p56 = scmp.ne.s32.totalorder %s44, %s45
      %p57 = scmp.eq.s32.totalorder %s19, 1
      %p58 = por %p56, %p57
      %p60 = scmp.ne.s32.totalorder %s45, %s59
      %p61 = scmp.eq.s32.totalorder %s19, 0
      %p62 = por %p60, %p61
      %s63 = ssub.s32 %s13, %s20
      %p64 = scmp.eq.s32.totalorder %s63, 0
      %s66 = sadd.s32 %s65, 1
      %s67 = scalar_select %p64, %s65, %s66
      %p70 = pneg %p64
      %p71 = scmp.eq.s32.totalorder %s13, 1
      %p72 = por %p70, %p71
      %p73 = scmp.ne.s32.totalorder %s65, %s68
      %p74 = scmp.eq.s32.totalorder %s13, 0
      %p75 = por %p73, %p74
      %p76 = scmp.ne.s32.totalorder %s65, %s68
      %p77 = scmp.eq.s32.totalorder %s18, 1
      %p78 = por %p76, %p77
      %p79 = scmp.ne.s32.totalorder %s68, %s69
      %p80 = scmp.eq.s32.totalorder %s18, 0
      %p81 = por %p79, %p80
      %p82 = scmp.ne.s32.totalorder %s68, %s69
      %p83 = scmp.eq.s32.totalorder %s19, 1
      %p84 = por %p82, %p83
      %p86 = scmp.ne.s32.totalorder %s69, %s85
      %p87 = scmp.eq.s32.totalorder %s19, 0
      %p88 = por %p86, %p87
      %s89 = ssub.s32 %s13, %s20
      %p90 = scmp.eq.s32.totalorder %s89, 0
      %s92 = sadd.s32 %s91, 1
      %s93 = scalar_select %p90, %s91, %s92
      %p96 = pneg %p90
      %p97 = scmp.eq.s32.totalorder %s13, 1
      %p98 = por %p96, %p97
      %p99 = scmp.ne.s32.totalorder %s91, %s94
      %p100 = scmp.eq.s32.totalorder %s13, 0
      %p101 = por %p99, %p100
      %p102 = scmp.ne.s32.totalorder %s91, %s94
      %p103 = scmp.eq.s32.totalorder %s18, 1
      %p104 = por %p102, %p103
      %p105 = scmp.ne.s32.totalorder %s94, %s95
      %p106 = scmp.eq.s32.totalorder %s18, 0
      %p107 = por %p105, %p106
      %p108 = scmp.ne.s32.totalorder %s94, %s95
      %p109 = scmp.eq.s32.totalorder %s19, 1
      %p110 = por %p108, %p109
      %p112 = scmp.ne.s32.totalorder %s95, %s111
      %p113 = scmp.eq.s32.totalorder %s19, 0
      %p114 = por %p112, %p113
      %s116 = sadd.s32 %s115, 1
      %p119 = scmp.eq.s32.totalorder %s13, 1
      %p120 = scmp.ne.s32.totalorder %s115, %s117
      %p121 = scmp.eq.s32.totalorder %s13, 0
      %p122 = por %p120, %p121
      %p123 = scmp.ne.s32.totalorder %s115, %s117
      %p124 = scmp.eq.s32.totalorder %s18, 1
      %p125 = por %p123, %p124
      %p126 = scmp.ne.s32.totalorder %s117, %s118
      %p127 = scmp.eq.s32.totalorder %s18, 0
      %p128 = por %p126, %p127
      %p129 = scmp.ne.s32.totalorder %s117, %s118
      %p130 = scmp.eq.s32.totalorder %s19, 1
      %p131 = por %p129, %p130
      %p133 = scmp.ne.s32.totalorder %s118, %s132
      %p134 = scmp.eq.s32.totalorder %s19, 0
      %p135 = por %p133, %p134
      %p136 = scmp.le.s32.totalorder 1, %s13
      %p137 = scmp.lt.s32.totalorder %s13, 3
      %p138 = pnand %p136, %p137
      %p139 = pneg %p138
      // Predicated region
      $region9: #{tpu_custom_call.1} parent=5 // pred_check
        _
      $region10: #{tpu_custom_call.1} parent=5 // pred_check_branch
        %141 = sbr.rel (%p138) target = $region12
      $region11: #{tpu_custom_call.1} parent=5 // pred_region
        %s142 = ssub.s32 %s13, 1
        // Predicated region
        $region13: #{tpu_custom_call.1} parent=11 // pred_check
          %p143 = pneg %p34
        $region14: #{tpu_custom_call.1} parent=11 // pred_check_branch
          %145 = sbr.rel (%p143) target = $region16
        $region15: #{tpu_custom_call.1} parent=11 // pred_region
          %147 = vsyncadd [#allocation3], 0
          %s148 = sshll.u32 %s0, 4
          %s149 = int_to_ptr.hbm [resolvable:$true] %s148
          %s150 = sshll.u32 [#allocation2], 4
          %s151 = int_to_ptr.vmem [resolvable:$true] %s150
          %156 = dma.hbm_to_vmem [thread:$0]  %s149, 1024, %s151, [#allocation3], 64, 64, 4
        $region16: #{tpu_custom_call.1} parent=11 // pred_fallthru
          _
        // Predicated region
        $region17: #{tpu_custom_call.1} parent=11 // pred_check
          %p157 = pneg %p55
        $region18: #{tpu_custom_call.1} parent=11 // pred_check_branch
          %159 = sbr.rel (%p157) target = $region20
        $region19: #{tpu_custom_call.1} parent=11 // pred_region
          %161 = vsyncadd [#allocation6], 0
          %s162 = sshll.u32 %s1, 4
          %s163 = int_to_ptr.hbm [resolvable:$true] %s162
          %s164 = sshll.u32 [#allocation5], 4
          %s165 = int_to_ptr.vmem [resolvable:$true] %s164
          %170 = dma.hbm_to_vmem [thread:$0]  %s163, 2048, %s165, [#allocation6], 128, 128, 8
        $region20: #{tpu_custom_call.1} parent=11 // pred_fallthru
          _
      $region12: #{tpu_custom_call.1} parent=5 // pred_fallthru
        _
      %p171 = scmp.lt.s32.totalorder %s13, 2
      // Predicated region
      $region21: #{tpu_custom_call.1} parent=5 // pred_check
        %p172 = pneg %p171
      $region22: #{tpu_custom_call.1} parent=5 // pred_check_branch
        %174 = sbr.rel (%p172) target = $region24
      $region23: #{tpu_custom_call.1} parent=5 // pred_region
        // Predicated region
        $region25: #{tpu_custom_call.1} parent=23 // pred_check
          %p175 = pneg %p75
        $region26: #{tpu_custom_call.1} parent=23 // pred_check_branch
          %177 = sbr.rel (%p175) target = $region28
        $region27: #{tpu_custom_call.1} parent=23 // pred_region
          %s178 = sand.u32 %s13, 1
          %s179 = scalar_lea.sflag [#allocation3], %s178
          %s180 = sand.u32 %s65, 1
          %s181 = smul.addr %s180, 64
          %s182 = scalar_lea.vmem [#allocation7], %s181
          %184 = vsyncadd %s179, 0
          %s185 = smul.addr %s13, 16
          %s186 = smul.addr %s185, 4
          %s187 = scalar_lea.hbm %s2, %s186
          %s188 = sshll.u32 %s187, 4
          %s189 = int_to_ptr.hbm [resolvable:$true] %s188
          %s190 = sshll.u32 %s182, 4
          %s191 = int_to_ptr.vmem [resolvable:$true] %s190
          %196 = dma.hbm_to_vmem [thread:$0]  %s189, 1024, %s191, %s179, 64, 64, 4
        $region28: #{tpu_custom_call.1} parent=23 // pred_fallthru
          _
        // Predicated region
        $region29: #{tpu_custom_call.1} parent=23 // pred_check
          %p197 = pneg %p101
        $region30: #{tpu_custom_call.1} parent=23 // pred_check_branch
          %199 = sbr.rel (%p197) target = $region32
        $region31: #{tpu_custom_call.1} parent=23 // pred_region
          %p200 = scmp.lt.s32.totalorder %s13, 1
          %s201 = scalar_select %p200, %s13, 1
          %s202 = scalar_lea.vmem %s3, %s201
        $region32: #{tpu_custom_call.1} parent=23 // pred_fallthru
          _
      $region24: #{tpu_custom_call.1} parent=5 // pred_fallthru
        _
      %p203 = scmp.le.s32.totalorder 1, %s13
      %p204 = scmp.lt.s32.totalorder %s13, 3
      %p205 = pnand %p203, %p204
      %p206 = pneg %p205
      // Predicated region
      $region33: #{tpu_custom_call.1} parent=5 // pred_check
        _
      $region34: #{tpu_custom_call.1} parent=5 // pred_check_branch
        %208 = sbr.rel (%p205) target = $region36
      $region35: #{tpu_custom_call.1} parent=5 // pred_region
        %s209 = ssub.s32 %s13, 1
        // Predicated region
        $region37: #{tpu_custom_call.1} parent=35 // pred_check
          %p210 = pneg %p34
        $region38: #{tpu_custom_call.1} parent=35 // pred_check_branch
          %212 = sbr.rel (%p210) target = $region40
        $region39: #{tpu_custom_call.1} parent=35 // pred_region
          %214 = dma.done [#allocation3], 1024
        $region40: #{tpu_custom_call.1} parent=35 // pred_fallthru
          _
        // Predicated region
        $region41: #{tpu_custom_call.1} parent=35 // pred_check
          %p215 = pneg %p55
        $region42: #{tpu_custom_call.1} parent=35 // pred_check_branch
          %217 = sbr.rel (%p215) target = $region44
        $region43: #{tpu_custom_call.1} parent=35 // pred_region
          %219 = dma.done [#allocation6], 2048
        $region44: #{tpu_custom_call.1} parent=35 // pred_fallthru
          _
        %s220 = sand.u32 %s18, 1
        %s221 = scalar_lea.sflag [#allocation3], %s220
        %s222 = sand.u32 %s68, 1
        %s223 = smul.addr %s222, 64
        %s224 = scalar_lea.vmem [#allocation7], %s223
        // Predicated region
        $region45: #{tpu_custom_call.1} parent=35 // pred_check
          %p225 = pneg %p81
        $region46: #{tpu_custom_call.1} parent=35 // pred_check_branch
          %227 = sbr.rel (%p225) target = $region48
        $region47: #{tpu_custom_call.1} parent=35 // pred_region
          %229 = dma.done %s221, 1024
        $region48: #{tpu_custom_call.1} parent=35 // pred_fallthru
          _
        %p230 = pneg %p34
        %p231 = pneg %p31
        %p232 = pneg %p55
        %p233 = pneg %p52
        %s234 = sand.u32 %s18, 1
        %s235 = scalar_lea.sflag [#allocation3], %s234
        %s236 = sand.u32 %s68, 1
        %s237 = smul.addr %s236, 64
        %s238 = scalar_lea.vmem [#allocation7], %s237
        %p239 = pneg %p81
        %p240 = pneg %p78
        %p241 = scmp.lt.s32.totalorder %s18, 1
        %s242 = scalar_select %p241, %s18, 1
        %s243 = scalar_lea.vmem %s3, %s242
        %p244 = pneg %p107
        %p245 = pneg %p104
        %p246 = pneg %p128
        %p247 = pneg %p125
        %p248 = scmp.lt.s32.totalorder %s18, 1
        %s249 = scalar_select %p248, %s18, 1
        %s250 = scalar_lea.vmem %s3, %s249
        %p251 = scmp.eq.s32.totalorder %s18, 0
        // Predicated region
        $region49: #{tpu_custom_call.1} parent=35 // pred_check
          %p252 = pneg %p251
        $region50: #{tpu_custom_call.1} parent=35 // pred_check_branch
          %254 = sbr.rel (%p252) target = $region52
        $region51: #{tpu_custom_call.1} parent=35 // pred_region
          %v255 = vld [vmem:[#allocation5] sm:$0xff]
          %v256 = vld [vmem:[#allocation5 + $0x8] sm:$0xff]
          %v257 = vld [vmem:[#allocation5 + $0x10] sm:$0xff]
          %v258 = vld [vmem:[#allocation5 + $0x18] sm:$0xff]
          %v259 = vld [vmem:[#allocation5 + $0x20] sm:$0xff]
          %v260 = vld [vmem:[#allocation5 + $0x28] sm:$0xff]
          %v261 = vld [vmem:[#allocation5 + $0x30] sm:$0xff]
          %v262 = vld [vmem:[#allocation5 + $0x38] sm:$0xff]
          %v263 = vld [vmem:[#allocation5 + $0x40] sm:$0xff]
          %v264 = vld [vmem:[#allocation5 + $0x48] sm:$0xff]
          %v265 = vld [vmem:[#allocation5 + $0x50] sm:$0xff]
          %v266 = vld [vmem:[#allocation5 + $0x58] sm:$0xff]
          %v267 = vld [vmem:[#allocation5 + $0x60] sm:$0xff]
          %v268 = vld [vmem:[#allocation5 + $0x68] sm:$0xff]
          %v269 = vld [vmem:[#allocation5 + $0x70] sm:$0xff]
          %v270 = vld [vmem:[#allocation5 + $0x78] sm:$0xff]
          %271 = vst [vmem:[#allocation8] sm:$0xff] %v255
          %272 = vst [vmem:[#allocation8 + $0x8] sm:$0xff] %v256
          %273 = vst [vmem:[#allocation8 + $0x10] sm:$0xff] %v257
          %274 = vst [vmem:[#allocation8 + $0x18] sm:$0xff] %v258
          %275 = vst [vmem:[#allocation8 + $0x20] sm:$0xff] %v259
          %276 = vst [vmem:[#allocation8 + $0x28] sm:$0xff] %v260
          %277 = vst [vmem:[#allocation8 + $0x30] sm:$0xff] %v261
          %278 = vst [vmem:[#allocation8 + $0x38] sm:$0xff] %v262
          %279 = vst [vmem:[#allocation8 + $0x40] sm:$0xff] %v263
          %280 = vst [vmem:[#allocation8 + $0x48] sm:$0xff] %v264
          %281 = vst [vmem:[#allocation8 + $0x50] sm:$0xff] %v265
          %282 = vst [vmem:[#allocation8 + $0x58] sm:$0xff] %v266
          %283 = vst [vmem:[#allocation8 + $0x60] sm:$0xff] %v267
          %284 = vst [vmem:[#allocation8 + $0x68] sm:$0xff] %v268
          %285 = vst [vmem:[#allocation8 + $0x70] sm:$0xff] %v269
          %286 = vst [vmem:[#allocation8 + $0x78] sm:$0xff] %v270
        $region52: #{tpu_custom_call.1} parent=35 // pred_fallthru
          _
        %v287 = vld [vmem:[#allocation8] sm:$0xff]
        %v288 = vld [vmem:[#allocation8 + $0x8] sm:$0xff]
        %v289 = vld [vmem:[#allocation8 + $0x10] sm:$0xff]
        %v290 = vld [vmem:[#allocation8 + $0x18] sm:$0xff]
        %v291 = vld [vmem:[#allocation8 + $0x20] sm:$0xff]
        %v292 = vld [vmem:[#allocation8 + $0x28] sm:$0xff]
        %v293 = vld [vmem:[#allocation8 + $0x30] sm:$0xff]
        %v294 = vld [vmem:[#allocation8 + $0x38] sm:$0xff]
        %v295 = vld [vmem:[#allocation8 + $0x40] sm:$0xff]
        %v296 = vld [vmem:[#allocation8 + $0x48] sm:$0xff]
        %v297 = vld [vmem:[#allocation8 + $0x50] sm:$0xff]
        %v298 = vld [vmem:[#allocation8 + $0x58] sm:$0xff]
        %v299 = vld [vmem:[#allocation8 + $0x60] sm:$0xff]
        %v300 = vld [vmem:[#allocation8 + $0x68] sm:$0xff]
        %v301 = vld [vmem:[#allocation8 + $0x70] sm:$0xff]
        %v302 = vld [vmem:[#allocation8 + $0x78] sm:$0xff]
        %v303 = vpack.c.bf16 %v288, %v287
        %v304 = vpack.c.bf16 %v290, %v289
        %v305 = vpack.c.bf16 %v292, %v291
        %v306 = vpack.c.bf16 %v294, %v293
        %v307 = vpack.c.bf16 %v296, %v295
        %v308 = vpack.c.bf16 %v298, %v297
        %v309 = vpack.c.bf16 %v300, %v299
        %v310 = vpack.c.bf16 %v302, %v301
        %v311 = vld [vmem:[%s224] sm:$0xf]
        %v312 = vld [vmem:[%s224 + $0x4] sm:$0xf]
        %v313 = vld [vmem:[%s224 + $0x8] sm:$0xf]
        %v314 = vld [vmem:[%s224 + $0xc] sm:$0xf]
        %v315 = vld [vmem:[%s224 + $0x10] sm:$0xf]
        %v316 = vld [vmem:[%s224 + $0x14] sm:$0xf]
        %v317 = vld [vmem:[%s224 + $0x18] sm:$0xf]
        %v318 = vld [vmem:[%s224 + $0x1c] sm:$0xf]
        %v319 = vld [vmem:[%s224 + $0x20] sm:$0xf]
        %v320 = vld [vmem:[%s224 + $0x24] sm:$0xf]
        %v321 = vld [vmem:[%s224 + $0x28] sm:$0xf]
        %v322 = vld [vmem:[%s224 + $0x2c] sm:$0xf]
        %v323 = vld [vmem:[%s224 + $0x30] sm:$0xf]
        %v324 = vld [vmem:[%s224 + $0x34] sm:$0xf]
        %v325 = vld [vmem:[%s224 + $0x38] sm:$0xf]
        %v326 = vld [vmem:[%s224 + $0x3c] sm:$0xf]
        %v327 = vld [vmem:[%s250] sm:$0x1]
        %v344 = vunpack.c.l.b16 %v311
        %v345 = vunpack.c.l.b16 %v312
        %v346 = vunpack.c.l.b16 %v313
        %v347 = vunpack.c.l.b16 %v314
        %v348 = vunpack.c.l.b16 %v315
        %v349 = vunpack.c.l.b16 %v316
        %v350 = vunpack.c.l.b16 %v317
        %v351 = vunpack.c.l.b16 %v318
        %v352 = vunpack.c.l.b16 %v319
        %v353 = vunpack.c.l.b16 %v320
        %v354 = vunpack.c.l.b16 %v321
        %v355 = vunpack.c.l.b16 %v322
        %v356 = vunpack.c.l.b16 %v323
        %v357 = vunpack.c.l.b16 %v324
        %v358 = vunpack.c.l.b16 %v325
        %v359 = vunpack.c.l.b16 %v326
        %v360 = vpack.c.b16 %v345, %v344
        %v361 = vpack.c.b16 %v347, %v346
        %v362 = vpack.c.b16 %v349, %v348
        %v363 = vpack.c.b16 %v351, %v350
        %v364 = vpack.c.b16 %v353, %v352
        %v365 = vpack.c.b16 %v355, %v354
        %v366 = vpack.c.b16 %v357, %v356
        %v367 = vpack.c.b16 %v359, %v358
        %376 = vmatpush.bf16.msra.mxu0 %v367
        %377 = vmatpush.bf16.msra.mxu0 %v366
        %378 = vmatpush.bf16.msra.mxu0 %v365
        %379 = vmatpush.bf16.msra.mxu0 %v364
        %380 = vmatpush.bf16.msra.mxu0 %v363
        %381 = vmatpush.bf16.msra.mxu0 %v362
        %382 = vmatpush.bf16.msra.mxu0 %v361
        %383 = vmatpush.bf16.msra.mxu0 %v360
        %384 = vmatmul.bf16.gmra.mxu0 %v303
        %v385 = vpop.f32.mrf.mxu0
        %v386 = vadd.f32 0.0, %v385
        %v387 = vpop.f32.mrf.mxu0
        %v388 = vadd.f32 0.0, %v387
        %389 = vmatmul.bf16.gmra.mxu0 %v304
        %v390 = vpop.f32.mrf.mxu0
        %v391 = vadd.f32 0.0, %v390
        %v392 = vpop.f32.mrf.mxu0
        %v393 = vadd.f32 0.0, %v392
        %394 = vmatmul.bf16.gmra.mxu0 %v305
        %v395 = vpop.f32.mrf.mxu0
        %v396 = vadd.f32 0.0, %v395
        %v397 = vpop.f32.mrf.mxu0
        %v398 = vadd.f32 0.0, %v397
        %399 = vmatmul.bf16.gmra.mxu0 %v306
        %v400 = vpop.f32.mrf.mxu0
        %v401 = vadd.f32 0.0, %v400
        %v402 = vpop.f32.mrf.mxu0
        %v403 = vadd.f32 0.0, %v402
        %404 = vmatmul.bf16.gmra.mxu0 %v307
        %v405 = vpop.f32.mrf.mxu0
        %v406 = vadd.f32 0.0, %v405
        %v407 = vpop.f32.mrf.mxu0
        %v408 = vadd.f32 0.0, %v407
        %409 = vmatmul.bf16.gmra.mxu0 %v308
        %v410 = vpop.f32.mrf.mxu0
        %v411 = vadd.f32 0.0, %v410
        %v412 = vpop.f32.mrf.mxu0
        %v413 = vadd.f32 0.0, %v412
        %414 = vmatmul.bf16.gmra.mxu0 %v309
        %v415 = vpop.f32.mrf.mxu0
        %v416 = vadd.f32 0.0, %v415
        %v417 = vpop.f32.mrf.mxu0
        %v418 = vadd.f32 0.0, %v417
        %419 = vmatmul.bf16.gmra.mxu0 %v310
        %v420 = vpop.f32.mrf.mxu0
        %v421 = vadd.f32 0.0, %v420
        %v422 = vpop.f32.mrf.mxu0
        %v423 = vadd.f32 0.0, %v422
        %424 = vdwg.mxu0
        %v425 = vld [vmem:[#allocation2] sm:$0xf]
        %v426 = vld [vmem:[#allocation2 + $0x4] sm:$0xf]
        %v427 = vld [vmem:[#allocation2 + $0x8] sm:$0xf]
        %v428 = vld [vmem:[#allocation2 + $0xc] sm:$0xf]
        %v429 = vld [vmem:[#allocation2 + $0x10] sm:$0xf]
        %v430 = vld [vmem:[#allocation2 + $0x14] sm:$0xf]
        %v431 = vld [vmem:[#allocation2 + $0x18] sm:$0xf]
        %v432 = vld [vmem:[#allocation2 + $0x1c] sm:$0xf]
        %v433 = vld [vmem:[#allocation2 + $0x20] sm:$0xf]
        %v434 = vld [vmem:[#allocation2 + $0x24] sm:$0xf]
        %v435 = vld [vmem:[#allocation2 + $0x28] sm:$0xf]
        %v436 = vld [vmem:[#allocation2 + $0x2c] sm:$0xf]
        %v437 = vld [vmem:[#allocation2 + $0x30] sm:$0xf]
        %v438 = vld [vmem:[#allocation2 + $0x34] sm:$0xf]
        %v439 = vld [vmem:[#allocation2 + $0x38] sm:$0xf]
        %v440 = vld [vmem:[#allocation2 + $0x3c] sm:$0xf]
        %v441 = vpack.c.bf16 %v388, %v386
        %v442 = vpack.c.bf16 %v393, %v391
        %v443 = vpack.c.bf16 %v398, %v396
        %v444 = vpack.c.bf16 %v403, %v401
        %v445 = vpack.c.bf16 %v408, %v406
        %v446 = vpack.c.bf16 %v413, %v411
        %v447 = vpack.c.bf16 %v418, %v416
        %v448 = vpack.c.bf16 %v423, %v421
        %v450 = vperm.slane %v327, 0
        %v468 = vunpack.c.l.b16 %v425
        %v469 = vunpack.c.l.b16 %v426
        %v470 = vunpack.c.l.b16 %v427
        %v471 = vunpack.c.l.b16 %v428
        %v472 = vunpack.c.l.b16 %v429
        %v473 = vunpack.c.l.b16 %v430
        %v474 = vunpack.c.l.b16 %v431
        %v475 = vunpack.c.l.b16 %v432
        %v476 = vunpack.c.l.b16 %v433
        %v477 = vunpack.c.l.b16 %v434
        %v478 = vunpack.c.l.b16 %v435
        %v479 = vunpack.c.l.b16 %v436
        %v480 = vunpack.c.l.b16 %v437
        %v481 = vunpack.c.l.b16 %v438
        %v482 = vunpack.c.l.b16 %v439
        %v483 = vunpack.c.l.b16 %v440
        %v484 = vpack.c.b16 %v469, %v468
        %v485 = vpack.c.b16 %v471, %v470
        %v486 = vpack.c.b16 %v473, %v472
        %v487 = vpack.c.b16 %v475, %v474
        %v488 = vpack.c.b16 %v477, %v476
        %v489 = vpack.c.b16 %v479, %v478
        %v490 = vpack.c.b16 %v481, %v480
        %v491 = vpack.c.b16 %v483, %v482
        %500 = vmatpush.bf16.msra.mxu0 %v448
        %501 = vmatpush.bf16.msra.mxu0 %v447
        %502 = vmatpush.bf16.msra.mxu0 %v446
        %503 = vmatpush.bf16.msra.mxu0 %v445
        %504 = vmatpush.bf16.msra.mxu0 %v444
        %505 = vmatpush.bf16.msra.mxu0 %v443
        %506 = vmatpush.bf16.msra.mxu0 %v442
        %507 = vmatpush.bf16.msra.mxu0 %v441
        %508 = vmatmul.bf16.gmra.mxu0 %v484
        %v509 = vpop.f32.mrf.mxu0
        %v510 = vadd.f32 %v450, %v509
        %v511 = vpop.f32.mrf.mxu0
        %v512 = vadd.f32 %v450, %v511
        %513 = vmatmul.bf16.gmra.mxu0 %v485
        %v514 = vpop.f32.mrf.mxu0
        %v515 = vadd.f32 %v450, %v514
        %v516 = vpop.f32.mrf.mxu0
        %v517 = vadd.f32 %v450, %v516
        %518 = vmatmul.bf16.gmra.mxu0 %v486
        %v519 = vpop.f32.mrf.mxu0
        %v520 = vadd.f32 %v450, %v519
        %v521 = vpop.f32.mrf.mxu0
        %v522 = vadd.f32 %v450, %v521
        %523 = vmatmul.bf16.gmra.mxu0 %v487
        %v524 = vpop.f32.mrf.mxu0
        %v525 = vadd.f32 %v450, %v524
        %v526 = vpop.f32.mrf.mxu0
        %v527 = vadd.f32 %v450, %v526
        %528 = vmatmul.bf16.gmra.mxu0 %v488
        %v529 = vpop.f32.mrf.mxu0
        %v530 = vadd.f32 %v450, %v529
        %v531 = vpop.f32.mrf.mxu0
        %v532 = vadd.f32 %v450, %v531
        %533 = vmatmul.bf16.gmra.mxu0 %v489
        %v534 = vpop.f32.mrf.mxu0
        %v535 = vadd.f32 %v450, %v534
        %v536 = vpop.f32.mrf.mxu0
        %v537 = vadd.f32 %v450, %v536
        %538 = vmatmul.bf16.gmra.mxu0 %v490
        %v539 = vpop.f32.mrf.mxu0
        %v540 = vadd.f32 %v450, %v539
        %v541 = vpop.f32.mrf.mxu0
        %v542 = vadd.f32 %v450, %v541
        %543 = vmatmul.bf16.gmra.mxu0 %v491
        %v544 = vpop.f32.mrf.mxu0
        %v545 = vadd.f32 %v450, %v544
        %v546 = vpop.f32.mrf.mxu0
        %v547 = vadd.f32 %v450, %v546
        %548 = vdwg.mxu0
        %v549 = vmax.f32 %v510, 0.0
        %v550 = vmax.f32 %v512, 0.0
        %v551 = vmax.f32 %v515, 0.0
        %v552 = vmax.f32 %v517, 0.0
        %v553 = vmax.f32 %v520, 0.0
        %v554 = vmax.f32 %v522, 0.0
        %v555 = vmax.f32 %v525, 0.0
        %v556 = vmax.f32 %v527, 0.0
        %v557 = vmax.f32 %v530, 0.0
        %v558 = vmax.f32 %v532, 0.0
        %v559 = vmax.f32 %v535, 0.0
        %v560 = vmax.f32 %v537, 0.0
        %v561 = vmax.f32 %v540, 0.0
        %v562 = vmax.f32 %v542, 0.0
        %v563 = vmax.f32 %v545, 0.0
        %v564 = vmax.f32 %v547, 0.0
        %565 = vst [vmem:[#allocation8] sm:$0xff] %v549
        %566 = vst [vmem:[#allocation8 + $0x8] sm:$0xff] %v550
        %567 = vst [vmem:[#allocation8 + $0x10] sm:$0xff] %v551
        %568 = vst [vmem:[#allocation8 + $0x18] sm:$0xff] %v552
        %569 = vst [vmem:[#allocation8 + $0x20] sm:$0xff] %v553
        %570 = vst [vmem:[#allocation8 + $0x28] sm:$0xff] %v554
        %571 = vst [vmem:[#allocation8 + $0x30] sm:$0xff] %v555
        %572 = vst [vmem:[#allocation8 + $0x38] sm:$0xff] %v556
        %573 = vst [vmem:[#allocation8 + $0x40] sm:$0xff] %v557
        %574 = vst [vmem:[#allocation8 + $0x48] sm:$0xff] %v558
        %575 = vst [vmem:[#allocation8 + $0x50] sm:$0xff] %v559
        %576 = vst [vmem:[#allocation8 + $0x58] sm:$0xff] %v560
        %577 = vst [vmem:[#allocation8 + $0x60] sm:$0xff] %v561
        %578 = vst [vmem:[#allocation8 + $0x68] sm:$0xff] %v562
        %579 = vst [vmem:[#allocation8 + $0x70] sm:$0xff] %v563
        %580 = vst [vmem:[#allocation8 + $0x78] sm:$0xff] %v564
        // Predicated region
        $region53: #{tpu_custom_call.1} parent=35 // pred_check
          %p581 = pneg %p125
        $region54: #{tpu_custom_call.1} parent=35 // pred_check_branch
          %583 = sbr.rel (%p581) target = $region56
        $region55: #{tpu_custom_call.1} parent=35 // pred_region
          %585 = vsyncadd [#allocation4], 0
          %s586 = sshll.u32 [#allocation8], 4
          %s587 = int_to_ptr.vmem [resolvable:$true] %s586
          %s588 = sshll.u32 %s4, 4
          %s589 = int_to_ptr.hbm [resolvable:$true] %s588
          %594 = dma.vmem_to_hbm [thread:$0]  %s587, 2048, %s589, [#allocation4], 128, 128, 8
        $region56: #{tpu_custom_call.1} parent=35 // pred_fallthru
          _
        // Predicated region
        $region57: #{tpu_custom_call.1} parent=35 // pred_check
          %p595 = pneg %p125
        $region58: #{tpu_custom_call.1} parent=35 // pred_check_branch
          %597 = sbr.rel (%p595) target = $region60
        $region59: #{tpu_custom_call.1} parent=35 // pred_region
          %599 = dma.done [#allocation4], 2048
        $region60: #{tpu_custom_call.1} parent=35 // pred_fallthru
          _
      $region36: #{tpu_custom_call.1} parent=5 // pred_fallthru
        _
      %p600 = scmp.le.s32.totalorder 2, %s13
      // Predicated region
      $region61: #{tpu_custom_call.1} parent=5 // pred_check
        %p601 = pneg %p600
      $region62: #{tpu_custom_call.1} parent=5 // pred_check_branch
        %603 = sbr.rel (%p601) target = $region64
      $region63: #{tpu_custom_call.1} parent=5 // pred_region
        %s604 = ssub.s32 %s13, 2
      $region64: #{tpu_custom_call.1} parent=5 // pred_fallthru
        _
    $region6: #{tpu_custom_call.1} parent=1 // loop_footer
      %s17 = sadd.s32 1, %s13
    $region7: #{tpu_custom_call.1} parent=1 // loop_footer_branch
      %12 = sbr.rel target = $region3
    $region8: #{tpu_custom_call.1} parent=1 // loop_exit
      _
    %605 = vsyncpa [#allocation3], 1
    %s606 = scalar_lea.sflag [#allocation3], 1
    %607 = vsyncpa %s606, 1
    %608 = vsyncpa [#allocation6], 1
    %609 = vsyncpa [#allocation4], 1
    %s610 = scalar_lea.sflag [#allocation4], 1
    %611 = vsyncpa %s610, 1

// kernel: tpu_custom_call.1
$region0: #{tpu_custom_call.1}
  #allocation0 [shape = 'u32[]', space=smem, size = 0x4, offset = 0x4, fixed_abs, tag = 'smem constant byte address 0x4 - core index']
  #allocation1 [shape = 'u32[72,128]{1,0:T(1,128)}', space=vmem, size = 0x9000, scoped, tag = 'internal scratch']
  %s0 = inlined_call_operand.hbm [shape: bf16[128,128], index: 0, kind: input, shape index: {}]
  %s1 = inlined_call_operand.hbm [shape: f32[128,128], index: 1, kind: input, shape index: {}]
  %s2 = inlined_call_operand.hbm [shape: bf16[2,128,128], index: 2, kind: input, shape index: {}]
  %s3 = inlined_call_operand.vmem [shape: f32[2,1,128], index: 3, kind: input, shape index: {}]
  %s4 = inlined_call_operand.hbm [shape: f32[128,128], index: 4, kind: output, shape index: {}]
  %s5 = sld [smem:[#allocation0]]
  $region65: #{tpu_custom_call.1} parent=0
    _
  %s7 = ssub.s32 1, %s5
  %s8 = scalar_select 0, %s7, %s5
  $region1: #{tpu_custom_call.1} parent=0
    #allocation2 [shape = 'u8[32768]{0}', space=vmem, size = 0x8000, scoped, tag = 'input window, operand 0, single buffered']
    #allocation3 [shape = 's32[2]{0}', space=sflag, size = 0x8, scoped, tag = 'scoped memory for tpu_custom_call.1']
    #allocation4 [shape = 's32[2]{0}', space=sflag, size = 0x8, scoped, tag = 'scoped memory for tpu_custom_call.1']
    #allocation5 [shape = 'u8[65536]{0}', space=vmem, size = 0x10000, scoped, tag = 'input window, operand 1, single buffered']
    #allocation6 [shape = 's32[1]{0}', space=sflag, size = 0x4, scoped, tag = 'scoped memory for tpu_custom_call.1']
    #allocation7 [shape = 'u8[65536]{0}', space=vmem, size = 0x10000, scoped, tag = 'input window, operand 2']
    #allocation8 [shape = 'u8[65536]{0}', space=vmem, size = 0x10000, scoped, tag = 'output window, operand 0, single buffered']
    %9 = vsyncpa [#allocation3], 0
    %10 = vsyncpa [#allocation6], 0
    %11 = vsyncpa [#allocation4], 0
    loop: start=0, step=1, limit=4
    $region2: #{tpu_custom_call.1} parent=1 // loop_pre_header
      _
    $region3: #{tpu_custom_call.1} parent=1 // loop_header
      %s13 = sphi 0, %s17
      %p14 = scmp.ge.s32.totalorder %s13, 4
      %s21 = sphi 0, %s21
      %s23 = sphi 0, %s21
      %s24 = sphi 0, %s23
      %s38 = sphi 0, %s24
      %s42 = sphi 0, %s42
      %s44 = sphi 0, %s42
      %s45 = sphi 0, %s44
      %s59 = sphi 0, %s45
      %s65 = sphi 0, %s67
      %s68 = sphi 0, %s65
      %s69 = sphi 0, %s68
      %s85 = sphi 0, %s69
      %s91 = sphi 0, %s93
      %s94 = sphi 0, %s91
      %s95 = sphi 0, %s94
      %s111 = sphi 0, %s95
      %s115 = sphi 0, %s115
      %s117 = sphi 0, %s115
      %s118 = sphi 0, %s117
      %s132 = sphi 0, %s118
    $region4: #{tpu_custom_call.1} parent=1 // loop_header_branch
      %16 = sbr.rel (%p14) target = $region8
    $region5: #{tpu_custom_call.1} parent=1 // loop_body
      %s18 = ssub.s32 %s13, 1
      %s19 = ssub.s32 %s13, 2
      %s20 = sadd.s32 %s13, 1
      %s22 = sadd.s32 %s21, 1
      %p25 = scmp.eq.s32.totalorder %s13, 1
      %p26 = scmp.ne.s32.totalorder %s21, %s23
      %p27 = scmp.eq.s32.totalorder %s13, 0
      %p28 = por %p26, %p27
      %p29 = scmp.ne.s32.totalorder %s21, %s23
      %p30 = scmp.eq.s32.totalorder %s18, 1
      %p31 = por %p29, %p30
      %p32 = scmp.ne.s32.totalorder %s23, %s24
      %p33 = scmp.eq.s32.totalorder %s18, 0
      %p34 = por %p32, %p33
      %p35 = scmp.ne.s32.totalorder %s23, %s24
      %p36 = scmp.eq.s32.totalorder %s19, 1
      %p37 = por %p35, %p36
      %p39 = scmp.ne.s32.totalorder %s24, %s38
      %p40 = scmp.eq.s32.totalorder %s19, 0
      %p41 = por %p39, %p40
      %s43 = sadd.s32 %s42, 1
      %p46 = scmp.eq.s32.totalorder %s13, 1
      %p47 = scmp.ne.s32.totalorder %s42, %s44
      %p48 = scmp.eq.s32.totalorder %s13, 0
      %p49 = por %p47, %p48
      %p50 = scmp.ne.s32.totalorder %s42, %s44
      %p51 = scmp.eq.s32.totalorder %s18, 1
      %p52 = por %p50, %p51
      %p53 = scmp.ne.s32.totalorder %s44, %s45
      %p54 = scmp.eq.s32.totalorder %s18, 0
      %p55 = por %p53, %p54
      %p56 = scmp.ne.s32.totalorder %s44, %s45
      %p57 = scmp.eq.s32.totalorder %s19, 1
      %p58 = por %p56, %p57
      %p60 = scmp.ne.s32.totalorder %s45, %s59
      %p61 = scmp.eq.s32.totalorder %s19, 0
      %p62 = por %p60, %p61
      %s63 = ssub.s32 %s13, %s20
      %p64 = scmp.eq.s32.totalorder %s63, 0
      %s66 = sadd.s32 %s65, 1
      %s67 = scalar_select %p64, %s65, %s66
      %p70 = pneg %p64
      %p71 = scmp.eq.s32.totalorder %s13, 1
      %p72 = por %p70, %p71
      %p73 = scmp.ne.s32.totalorder %s65, %s68
      %p74 = scmp.eq.s32.totalorder %s13, 0
      %p75 = por %p73, %p74
      %p76 = scmp.ne.s32.totalorder %s65, %s68
      %p77 = scmp.eq.s32.totalorder %s18, 1
      %p78 = por %p76, %p77
      %p79 = scmp.ne.s32.totalorder %s68, %s69
      %p80 = scmp.eq.s32.totalorder %s18, 0
      %p81 = por %p79, %p80
      %p82 = scmp.ne.s32.totalorder %s68, %s69
      %p83 = scmp.eq.s32.totalorder %s19, 1
      %p84 = por %p82, %p83
      %p86 = scmp.ne.s32.totalorder %s69, %s85
      %p87 = scmp.eq.s32.totalorder %s19, 0
      %p88 = por %p86, %p87
      %s89 = ssub.s32 %s13, %s20
      %p90 = scmp.eq.s32.totalorder %s89, 0
      %s92 = sadd.s32 %s91, 1
      %s93 = scalar_select %p90, %s91, %s92
      %p96 = pneg %p90
      %p97 = scmp.eq.s32.totalorder %s13, 1
      %p98 = por %p96, %p97
      %p99 = scmp.ne.s32.totalorder %s91, %s94
      %p100 = scmp.eq.s32.totalorder %s13, 0
      %p101 = por %p99, %p100
      %p102 = scmp.ne.s32.totalorder %s91, %s94
      %p103 = scmp.eq.s32.totalorder %s18, 1
      %p104 = por %p102, %p103
      %p105 = scmp.ne.s32.totalorder %s94, %s95
      %p106 = scmp.eq.s32.totalorder %s18, 0
      %p107 = por %p105, %p106
      %p108 = scmp.ne.s32.totalorder %s94, %s95
      %p109 = scmp.eq.s32.totalorder %s19, 1
      %p110 = por %p108, %p109
      %p112 = scmp.ne.s32.totalorder %s95, %s111
      %p113 = scmp.eq.s32.totalorder %s19, 0
      %p114 = por %p112, %p113
      %s116 = sadd.s32 %s115, 1
      %p119 = scmp.eq.s32.totalorder %s13, 1
      %p120 = scmp.ne.s32.totalorder %s115, %s117
      %p121 = scmp.eq.s32.totalorder %s13, 0
      %p122 = por %p120, %p121
      %p123 = scmp.ne.s32.totalorder %s115, %s117
      %p124 = scmp.eq.s32.totalorder %s18, 1
      %p125 = por %p123, %p124
      %p126 = scmp.ne.s32.totalorder %s117, %s118
      %p127 = scmp.eq.s32.totalorder %s18, 0
      %p128 = por %p126, %p127
      %p129 = scmp.ne.s32.totalorder %s117, %s118
      %p130 = scmp.eq.s32.totalorder %s19, 1
      %p131 = por %p129, %p130
      %p133 = scmp.ne.s32.totalorder %s118, %s132
      %p134 = scmp.eq.s32.totalorder %s19, 0
      %p135 = por %p133, %p134
      %p136 = scmp.le.s32.totalorder 1, %s13
      %p137 = scmp.lt.s32.totalorder %s13, 3
      %p138 = pnand %p136, %p137
      %p139 = pneg %p138
      // Predicated region
      $region9: #{tpu_custom_call.1} parent=5 // pred_check
        _
      $region10: #{tpu_custom_call.1} parent=5 // pred_check_branch
        %141 = sbr.rel (%p138) target = $region12
      $region11: #{tpu_custom_call.1} parent=5 // pred_region
        %s142 = ssub.s32 %s13, 1
        // Predicated region
        $region13: #{tpu_custom_call.1} parent=11 // pred_check
          %p143 = pneg %p34
        $region14: #{tpu_custom_call.1} parent=11 // pred_check_branch
          %145 = sbr.rel (%p143) target = $region16
        $region15: #{tpu_custom_call.1} parent=11 // pred_region
          %147 = vsyncadd [#allocation3], 0
          %s148 = sshll.u32 %s0, 4
          %s149 = int_to_ptr.hbm [resolvable:$true] %s148
          %s150 = sshll.u32 [#allocation2], 4
          %s151 = int_to_ptr.vmem [resolvable:$true] %s150
          %156 = dma.hbm_to_vmem [thread:$0]  %s149, 1024, %s151, [#allocation3], 64, 64, 4
        $region16: #{tpu_custom_call.1} parent=11 // pred_fallthru
          _
        // Predicated region
        $region17: #{tpu_custom_call.1} parent=11 // pred_check
          %p157 = pneg %p55
        $region18: #{tpu_custom_call.1} parent=11 // pred_check_branch
          %159 = sbr.rel (%p157) target = $region20
        $region19: #{tpu_custom_call.1} parent=11 // pred_region
          %161 = vsyncadd [#allocation6], 0
          %s162 = sshll.u32 %s1, 4
          %s163 = int_to_ptr.hbm [resolvable:$true] %s162
          %s164 = sshll.u32 [#allocation5], 4
          %s165 = int_to_ptr.vmem [resolvable:$true] %s164
          %170 = dma.hbm_to_vmem [thread:$0]  %s163, 2048, %s165, [#allocation6], 128, 128, 8
        $region20: #{tpu_custom_call.1} parent=11 // pred_fallthru
          _
      $region12: #{tpu_custom_call.1} parent=5 // pred_fallthru
        _
      %p171 = scmp.lt.s32.totalorder %s13, 2
      // Predicated region
      $region21: #{tpu_custom_call.1} parent=5 // pred_check
        %p172 = pneg %p171
      $region22: #{tpu_custom_call.1} parent=5 // pred_check_branch
        %174 = sbr.rel (%p172) target = $region24
      $region23: #{tpu_custom_call.1} parent=5 // pred_region
        // Predicated region
        $region25: #{tpu_custom_call.1} parent=23 // pred_check
          %p175 = pneg %p75
        $region26: #{tpu_custom_call.1} parent=23 // pred_check_branch
          %177 = sbr.rel (%p175) target = $region28
        $region27: #{tpu_custom_call.1} parent=23 // pred_region
          %s178 = sand.u32 %s13, 1
          %s179 = scalar_lea.sflag [#allocation3], %s178
          %s180 = sand.u32 %s65, 1
          %s181 = smul.addr %s180, 64
          %s182 = scalar_lea.vmem [#allocation7], %s181
          %184 = vsyncadd %s179, 0
          %s185 = smul.addr %s13, 16
          %s186 = smul.addr %s185, 4
          %s187 = scalar_lea.hbm %s2, %s186
          %s188 = sshll.u32 %s187, 4
          %s189 = int_to_ptr.hbm [resolvable:$true] %s188
          %s190 = sshll.u32 %s182, 4
          %s191 = int_to_ptr.vmem [resolvable:$true] %s190
          %196 = dma.hbm_to_vmem [thread:$0]  %s189, 1024, %s191, %s179, 64, 64, 4
        $region28: #{tpu_custom_call.1} parent=23 // pred_fallthru
          _
        // Predicated region
        $region29: #{tpu_custom_call.1} parent=23 // pred_check
          %p197 = pneg %p101
        $region30: #{tpu_custom_call.1} parent=23 // pred_check_branch
          %199 = sbr.rel (%p197) target = $region32
        $region31: #{tpu_custom_call.1} parent=23 // pred_region
          %p200 = scmp.lt.s32.totalorder %s13, 1
          %s201 = scalar_select %p200, %s13, 1
          %s202 = scalar_lea.vmem %s3, %s201
        $region32: #{tpu_custom_call.1} parent=23 // pred_fallthru
          _
      $region24: #{tpu_custom_call.1} parent=5 // pred_fallthru
        _
      %p203 = scmp.le.s32.totalorder 1, %s13
      %p204 = scmp.lt.s32.totalorder %s13, 3
      %p205 = pnand %p203, %p204
      %p206 = pneg %p205
      // Predicated region
      $region33: #{tpu_custom_call.1} parent=5 // pred_check
        _
      $region34: #{tpu_custom_call.1} parent=5 // pred_check_branch
        %208 = sbr.rel (%p205) target = $region36
      $region35: #{tpu_custom_call.1} parent=5 // pred_region
        %s209 = ssub.s32 %s13, 1
        // Predicated region
        $region37: #{tpu_custom_call.1} parent=35 // pred_check
          %p210 = pneg %p34
        $region38: #{tpu_custom_call.1} parent=35 // pred_check_branch
          %212 = sbr.rel (%p210) target = $region40
        $region39: #{tpu_custom_call.1} parent=35 // pred_region
          %214 = dma.done [#allocation3], 1024
        $region40: #{tpu_custom_call.1} parent=35 // pred_fallthru
          _
        // Predicated region
        $region41: #{tpu_custom_call.1} parent=35 // pred_check
          %p215 = pneg %p55
        $region42: #{tpu_custom_call.1} parent=35 // pred_check_branch
          %217 = sbr.rel (%p215) target = $region44
        $region43: #{tpu_custom_call.1} parent=35 // pred_region
          %219 = dma.done [#allocation6], 2048
        $region44: #{tpu_custom_call.1} parent=35 // pred_fallthru
          _
        %s220 = sand.u32 %s18, 1
        %s221 = scalar_lea.sflag [#allocation3], %s220
        %s222 = sand.u32 %s68, 1
        %s223 = smul.addr %s222, 64
        %s224 = scalar_lea.vmem [#allocation7], %s223
        // Predicated region
        $region45: #{tpu_custom_call.1} parent=35 // pred_check
          %p225 = pneg %p81
        $region46: #{tpu_custom_call.1} parent=35 // pred_check_branch
          %227 = sbr.rel (%p225) target = $region48
        $region47: #{tpu_custom_call.1} parent=35 // pred_region
          %229 = dma.done %s221, 1024
        $region48: #{tpu_custom_call.1} parent=35 // pred_fallthru
          _
        %p230 = pneg %p34
        %p231 = pneg %p31
        %p232 = pneg %p55
        %p233 = pneg %p52
        %s234 = sand.u32 %s18, 1
        %s235 = scalar_lea.sflag [#allocation3], %s234
        %s236 = sand.u32 %s68, 1
        %s237 = smul.addr %s236, 64
        %s238 = scalar_lea.vmem [#allocation7], %s237
        %p239 = pneg %p81
        %p240 = pneg %p78
        %p241 = scmp.lt.s32.totalorder %s18, 1
        %s242 = scalar_select %p241, %s18, 1
        %s243 = scalar_lea.vmem %s3, %s242
        %p244 = pneg %p107
        %p245 = pneg %p104
        %p246 = pneg %p128
        %p247 = pneg %p125
        %p248 = scmp.lt.s32.totalorder %s18, 1
        %s249 = scalar_select %p248, %s18, 1
        %s250 = scalar_lea.vmem %s3, %s249
        %p251 = scmp.eq.s32.totalorder %s18, 0
        // Predicated region
        $region49: #{tpu_custom_call.1} parent=35 // pred_check
          %p252 = pneg %p251
        $region50: #{tpu_custom_call.1} parent=35 // pred_check_branch
          %254 = sbr.rel (%p252) target = $region52
        $region51: #{tpu_custom_call.1} parent=35 // pred_region
          %v255 = vld [vmem:[#allocation5] sm:$0xff]
          %v256 = vld [vmem:[#allocation5 + $0x8] sm:$0xff]
          %v257 = vld [vmem:[#allocation5 + $0x10] sm:$0xff]
          %v258 = vld [vmem:[#allocation5 + $0x18] sm:$0xff]
          %v259 = vld [vmem:[#allocation5 + $0x20] sm:$0xff]
          %v260 = vld [vmem:[#allocation5 + $0x28] sm:$0xff]
          %v261 = vld [vmem:[#allocation5 + $0x30] sm:$0xff]
          %v262 = vld [vmem:[#allocation5 + $0x38] sm:$0xff]
          %v263 = vld [vmem:[#allocation5 + $0x40] sm:$0xff]
          %v264 = vld [vmem:[#allocation5 + $0x48] sm:$0xff]
          %v265 = vld [vmem:[#allocation5 + $0x50] sm:$0xff]
          %v266 = vld [vmem:[#allocation5 + $0x58] sm:$0xff]
          %v267 = vld [vmem:[#allocation5 + $0x60] sm:$0xff]
          %v268 = vld [vmem:[#allocation5 + $0x68] sm:$0xff]
          %v269 = vld [vmem:[#allocation5 + $0x70] sm:$0xff]
          %v270 = vld [vmem:[#allocation5 + $0x78] sm:$0xff]
          %271 = vst [vmem:[#allocation8] sm:$0xff] %v255
          %272 = vst [vmem:[#allocation8 + $0x8] sm:$0xff] %v256
          %273 = vst [vmem:[#allocation8 + $0x10] sm:$0xff] %v257
          %274 = vst [vmem:[#allocation8 + $0x18] sm:$0xff] %v258
          %275 = vst [vmem:[#allocation8 + $0x20] sm:$0xff] %v259
          %276 = vst [vmem:[#allocation8 + $0x28] sm:$0xff] %v260
          %277 = vst [vmem:[#allocation8 + $0x30] sm:$0xff] %v261
          %278 = vst [vmem:[#allocation8 + $0x38] sm:$0xff] %v262
          %279 = vst [vmem:[#allocation8 + $0x40] sm:$0xff] %v263
          %280 = vst [vmem:[#allocation8 + $0x48] sm:$0xff] %v264
          %281 = vst [vmem:[#allocation8 + $0x50] sm:$0xff] %v265
          %282 = vst [vmem:[#allocation8 + $0x58] sm:$0xff] %v266
          %283 = vst [vmem:[#allocation8 + $0x60] sm:$0xff] %v267
          %284 = vst [vmem:[#allocation8 + $0x68] sm:$0xff] %v268
          %285 = vst [vmem:[#allocation8 + $0x70] sm:$0xff] %v269
          %286 = vst [vmem:[#allocation8 + $0x78] sm:$0xff] %v270
        $region52: #{tpu_custom_call.1} parent=35 // pred_fallthru
          _
        %v287 = vld [vmem:[#allocation8] sm:$0xff]
        %v288 = vld [vmem:[#allocation8 + $0x8] sm:$0xff]
        %v289 = vld [vmem:[#allocation8 + $0x10] sm:$0xff]
        %v290 = vld [vmem:[#allocation8 + $0x18] sm:$0xff]
        %v291 = vld [vmem:[#allocation8 + $0x20] sm:$0xff]
        %v292 = vld [vmem:[#allocation8 + $0x28] sm:$0xff]
        %v293 = vld [vmem:[#allocation8 + $0x30] sm:$0xff]
        %v294 = vld [vmem:[#allocation8 + $0x38] sm:$0xff]
        %v295 = vld [vmem:[#allocation8 + $0x40] sm:$0xff]
        %v296 = vld [vmem:[#allocation8 + $0x48] sm:$0xff]
        %v297 = vld [vmem:[#allocation8 + $0x50] sm:$0xff]
        %v298 = vld [vmem:[#allocation8 + $0x58] sm:$0xff]
        %v299 = vld [vmem:[#allocation8 + $0x60] sm:$0xff]
        %v300 = vld [vmem:[#allocation8 + $0x68] sm:$0xff]
        %v301 = vld [vmem:[#allocation8 + $0x70] sm:$0xff]
        %v302 = vld [vmem:[#allocation8 + $0x78] sm:$0xff]
        %v303 = vpack.c.bf16 %v288, %v287
        %v304 = vpack.c.bf16 %v290, %v289
        %v305 = vpack.c.bf16 %v292, %v291
        %v306 = vpack.c.bf16 %v294, %v293
        %v307 = vpack.c.bf16 %v296, %v295
        %v308 = vpack.c.bf16 %v298, %v297
        %v309 = vpack.c.bf16 %v300, %v299
        %v310 = vpack.c.bf16 %v302, %v301
        %v311 = vld [vmem:[%s224] sm:$0xf]
        %v312 = vld [vmem:[%s224 + $0x4] sm:$0xf]
        %v313 = vld [vmem:[%s224 + $0x8] sm:$0xf]
        %v314 = vld [vmem:[%s224 + $0xc] sm:$0xf]
        %v315 = vld [vmem:[%s224 + $0x10] sm:$0xf]
        %v316 = vld [vmem:[%s224 + $0x14] sm:$0xf]
        %v317 = vld [vmem:[%s224 + $0x18] sm:$0xf]
        %v318 = vld [vmem:[%s224 + $0x1c] sm:$0xf]
        %v319 = vld [vmem:[%s224 + $0x20] sm:$0xf]
        %v320 = vld [vmem:[%s224 + $0x24] sm:$0xf]
        %v321 = vld [vmem:[%s224 + $0x28] sm:$0xf]
        %v322 = vld [vmem:[%s224 + $0x2c] sm:$0xf]
        %v323 = vld [vmem:[%s224 + $0x30] sm:$0xf]
        %v324 = vld [vmem:[%s224 + $0x34] sm:$0xf]
        %v325 = vld [vmem:[%s224 + $0x38] sm:$0xf]
        %v326 = vld [vmem:[%s224 + $0x3c] sm:$0xf]
        %v327 = vld [vmem:[%s250] sm:$0x1]
        %v344 = vunpack.c.l.b16 %v311
        %v345 = vunpack.c.l.b16 %v312
        %v346 = vunpack.c.l.b16 %v313
        %v347 = vunpack.c.l.b16 %v314
        %v348 = vunpack.c.l.b16 %v315
        %v349 = vunpack.c.l.b16 %v316
        %v350 = vunpack.c.l.b16 %v317
        %v351 = vunpack.c.l.b16 %v318
        %v352 = vunpack.c.l.b16 %v319
        %v353 = vunpack.c.l.b16 %v320
        %v354 = vunpack.c.l.b16 %v321
        %v355 = vunpack.c.l.b16 %v322
        %v356 = vunpack.c.l.b16 %v323
        %v357 = vunpack.c.l.b16 %v324
        %v358 = vunpack.c.l.b16 %v325
        %v359 = vunpack.c.l.b16 %v326
        %v360 = vpack.c.b16 %v345, %v344
        %v361 = vpack.c.b16 %v347, %v346
        %v362 = vpack.c.b16 %v349, %v348
        %v363 = vpack.c.b16 %v351, %v350
        %v364 = vpack.c.b16 %v353, %v352
        %v365 = vpack.c.b16 %v355, %v354
        %v366 = vpack.c.b16 %v357, %v356
        %v367 = vpack.c.b16 %v359, %v358
        %376 = vmatpush.bf16.msra.mxu0 %v367
        %377 = vmatpush.bf16.msra.mxu0 %v366
        %378 = vmatpush.bf16.msra.mxu0 %v365
        %379 = vmatpush.bf16.msra.mxu0 %v364
        %380 = vmatpush.bf16.msra.mxu0 %v363
        %381 = vmatpush.bf16.msra.mxu0 %v362
        %382 = vmatpush.bf16.msra.mxu0 %v361
        %383 = vmatpush.bf16.msra.mxu0 %v360
        %384 = vmatmul.bf16.gmra.mxu0 %v303
        %v385 = vpop.f32.mrf.mxu0
        %v386 = vadd.f32 0.0, %v385
        %v387 = vpop.f32.mrf.mxu0
        %v388 = vadd.f32 0.0, %v387
        %389 = vmatmul.bf16.gmra.mxu0 %v304
        %v390 = vpop.f32.mrf.mxu0
        %v391 = vadd.f32 0.0, %v390
        %v392 = vpop.f32.mrf.mxu0
        %v393 = vadd.f32 0.0, %v392
        %394 = vmatmul.bf16.gmra.mxu0 %v305
        %v395 = vpop.f32.mrf.mxu0
        %v396 = vadd.f32 0.0, %v395
        %v397 = vpop.f32.mrf.mxu0
        %v398 = vadd.f32 0.0, %v397
        %399 = vmatmul.bf16.gmra.mxu0 %v306
        %v400 = vpop.f32.mrf.mxu0
        %v401 = vadd.f32 0.0, %v400
        %v402 = vpop.f32.mrf.mxu0
        %v403 = vadd.f32 0.0, %v402
        %404 = vmatmul.bf16.gmra.mxu0 %v307
        %v405 = vpop.f32.mrf.mxu0
        %v406 = vadd.f32 0.0, %v405
        %v407 = vpop.f32.mrf.mxu0
        %v408 = vadd.f32 0.0, %v407
        %409 = vmatmul.bf16.gmra.mxu0 %v308
        %v410 = vpop.f32.mrf.mxu0
        %v411 = vadd.f32 0.0, %v410
        %v412 = vpop.f32.mrf.mxu0
        %v413 = vadd.f32 0.0, %v412
        %414 = vmatmul.bf16.gmra.mxu0 %v309
        %v415 = vpop.f32.mrf.mxu0
        %v416 = vadd.f32 0.0, %v415
        %v417 = vpop.f32.mrf.mxu0
        %v418 = vadd.f32 0.0, %v417
        %419 = vmatmul.bf16.gmra.mxu0 %v310
        %v420 = vpop.f32.mrf.mxu0
        %v421 = vadd.f32 0.0, %v420
        %v422 = vpop.f32.mrf.mxu0
        %v423 = vadd.f32 0.0, %v422
        %424 = vdwg.mxu0
        %v425 = vld [vmem:[#allocation2] sm:$0xf]
        %v426 = vld [vmem:[#allocation2 + $0x4] sm:$0xf]
        %v427 = vld [vmem:[#allocation2 + $0x8] sm:$0xf]
        %v428 = vld [vmem:[#allocation2 + $0xc] sm:$0xf]
        %v429 = vld [vmem:[#allocation2 + $0x10] sm:$0xf]
        %v430 = vld [vmem:[#allocation2 + $0x14] sm:$0xf]
        %v431 = vld [vmem:[#allocation2 + $0x18] sm:$0xf]
        %v432 = vld [vmem:[#allocation2 + $0x1c] sm:$0xf]
        %v433 = vld [vmem:[#allocation2 + $0x20] sm:$0xf]
        %v434 = vld [vmem:[#allocation2 + $0x24] sm:$0xf]
        %v435 = vld [vmem:[#allocation2 + $0x28] sm:$0xf]
        %v436 = vld [vmem:[#allocation2 + $0x2c] sm:$0xf]
        %v437 = vld [vmem:[#allocation2 + $0x30] sm:$0xf]
        %v438 = vld [vmem:[#allocation2 + $0x34] sm:$0xf]
        %v439 = vld [vmem:[#allocation2 + $0x38] sm:$0xf]
        %v440 = vld [vmem:[#allocation2 + $0x3c] sm:$0xf]
        %v441 = vpack.c.bf16 %v388, %v386
        %v442 = vpack.c.bf16 %v393, %v391
        %v443 = vpack.c.bf16 %v398, %v396
        %v444 = vpack.c.bf16 %v403, %v401
        %v445 = vpack.c.bf16 %v408, %v406
        %v446 = vpack.c.bf16 %v413, %v411
        %v447 = vpack.c.bf16 %v418, %v416
        %v448 = vpack.c.bf16 %v423, %v421
        %v450 = vperm.slane %v327, 0
        %v468 = vunpack.c.l.b16 %v425
        %v469 = vunpack.c.l.b16 %v426
        %v470 = vunpack.c.l.b16 %v427
        %v471 = vunpack.c.l.b16 %v428
        %v472 = vunpack.c.l.b16 %v429
        %v473 = vunpack.c.l.b16 %v430
        %v474 = vunpack.c.l.b16 %v431
        %v475 = vunpack.c.l.b16 %v432
        %v476 = vunpack.c.l.b16 %v433
        %v477 = vunpack.c.l.b16 %v434
        %v478 = vunpack.c.l.b16 %v435
        %v479 = vunpack.c.l.b16 %v436
        %v480 = vunpack.c.l.b16 %v437
        %v481 = vunpack.c.l.b16 %v438
        %v482 = vunpack.c.l.b16 %v439
        %v483 = vunpack.c.l.b16 %v440
        %v484 = vpack.c.b16 %v469, %v468
        %v485 = vpack.c.b16 %v471, %v470
        %v486 = vpack.c.b16 %v473, %v472
        %v487 = vpack.c.b16 %v475, %v474
        %v488 = vpack.c.b16 %v477, %v476
        %v489 = vpack.c.b16 %v479, %v478
        %v490 = vpack.c.b16 %v481, %v480
        %v491 = vpack.c.b16 %v483, %v482
        %500 = vmatpush.bf16.msra.mxu0 %v448
        %501 = vmatpush.bf16.msra.mxu0 %v447
        %502 = vmatpush.bf16.msra.mxu0 %v446
        %503 = vmatpush.bf16.msra.mxu0 %v445
        %504 = vmatpush.bf16.msra.mxu0 %v444
        %505 = vmatpush.bf16.msra.mxu0 %v443
        %506 = vmatpush.bf16.msra.mxu0 %v442
        %507 = vmatpush.bf16.msra.mxu0 %v441
        %508 = vmatmul.bf16.gmra.mxu0 %v484
        %v509 = vpop.f32.mrf.mxu0
        %v510 = vadd.f32 %v450, %v509
        %v511 = vpop.f32.mrf.mxu0
        %v512 = vadd.f32 %v450, %v511
        %513 = vmatmul.bf16.gmra.mxu0 %v485
        %v514 = vpop.f32.mrf.mxu0
        %v515 = vadd.f32 %v450, %v514
        %v516 = vpop.f32.mrf.mxu0
        %v517 = vadd.f32 %v450, %v516
        %518 = vmatmul.bf16.gmra.mxu0 %v486
        %v519 = vpop.f32.mrf.mxu0
        %v520 = vadd.f32 %v450, %v519
        %v521 = vpop.f32.mrf.mxu0
        %v522 = vadd.f32 %v450, %v521
        %523 = vmatmul.bf16.gmra.mxu0 %v487
        %v524 = vpop.f32.mrf.mxu0
        %v525 = vadd.f32 %v450, %v524
        %v526 = vpop.f32.mrf.mxu0
        %v527 = vadd.f32 %v450, %v526
        %528 = vmatmul.bf16.gmra.mxu0 %v488
        %v529 = vpop.f32.mrf.mxu0
        %v530 = vadd.f32 %v450, %v529
        %v531 = vpop.f32.mrf.mxu0
        %v532 = vadd.f32 %v450, %v531
        %533 = vmatmul.bf16.gmra.mxu0 %v489
        %v534 = vpop.f32.mrf.mxu0
        %v535 = vadd.f32 %v450, %v534
        %v536 = vpop.f32.mrf.mxu0
        %v537 = vadd.f32 %v450, %v536
        %538 = vmatmul.bf16.gmra.mxu0 %v490
        %v539 = vpop.f32.mrf.mxu0
        %v540 = vadd.f32 %v450, %v539
        %v541 = vpop.f32.mrf.mxu0
        %v542 = vadd.f32 %v450, %v541
        %543 = vmatmul.bf16.gmra.mxu0 %v491
        %v544 = vpop.f32.mrf.mxu0
        %v545 = vadd.f32 %v450, %v544
        %v546 = vpop.f32.mrf.mxu0
        %v547 = vadd.f32 %v450, %v546
        %548 = vdwg.mxu0
        %v549 = vmax.f32 %v510, 0.0
        %v550 = vmax.f32 %v512, 0.0
        %v551 = vmax.f32 %v515, 0.0
        %v552 = vmax.f32 %v517, 0.0
        %v553 = vmax.f32 %v520, 0.0
        %v554 = vmax.f32 %v522, 0.0
        %v555 = vmax.f32 %v525, 0.0
        %v556 = vmax.f32 %v527, 0.0
        %v557 = vmax.f32 %v530, 0.0
        %v558 = vmax.f32 %v532, 0.0
        %v559 = vmax.f32 %v535, 0.0
        %v560 = vmax.f32 %v537, 0.0
        %v561 = vmax.f32 %v540, 0.0
        %v562 = vmax.f32 %v542, 0.0
        %v563 = vmax.f32 %v545, 0.0
        %v564 = vmax.f32 %v547, 0.0
        %565 = vst [vmem:[#allocation8] sm:$0xff] %v549
        %566 = vst [vmem:[#allocation8 + $0x8] sm:$0xff] %v550
        %567 = vst [vmem:[#allocation8 + $0x10] sm:$0xff] %v551
        %568 = vst [vmem:[#allocation8 + $0x18] sm:$0xff] %v552
        %569 = vst [vmem:[#allocation8 + $0x20] sm:$0xff] %v553
        %570 = vst [vmem:[#allocation8 + $0x28] sm:$0xff] %v554
        %571 = vst [vmem:[#allocation8 + $0x30] sm:$0xff] %v555
        %572 = vst [vmem:[#allocation8 + $0x38] sm:$0xff] %v556
        %573 = vst [vmem:[#allocation8 + $0x40] sm:$0xff] %v557
        %574 = vst [vmem:[#allocation8 + $0x48] sm:$0xff] %v558
        %575 = vst [vmem:[#allocation8 + $0x50] sm:$0xff] %v559
        %576 = vst [vmem:[#allocation8 + $0x58] sm:$0xff] %v560
        %577 = vst [vmem:[#allocation8 + $0x60] sm:$0xff] %v561
        %578 = vst [vmem:[#allocation8 + $0x68] sm:$0xff] %v562
        %579 = vst [vmem:[#allocation8 + $0x70] sm:$0xff] %v563
        %580 = vst [vmem:[#allocation8 + $0x78] sm:$0xff] %v564
        // Predicated region
        $region53: #{tpu_custom_call.1} parent=35 // pred_check
          %p581 = pneg %p125
        $region54: #{tpu_custom_call.1} parent=35 // pred_check_branch
          %583 = sbr.rel (%p581) target = $region56
        $region55: #{tpu_custom_call.1} parent=35 // pred_region
          %585 = vsyncadd [#allocation4], 0
          %s586 = sshll.u32 [#allocation8], 4
          %s587 = int_to_ptr.vmem [resolvable:$true] %s586
          %s588 = sshll.u32 %s4, 4
          %s589 = int_to_ptr.hbm [resolvable:$true] %s588
          %594 = dma.vmem_to_hbm [thread:$0]  %s587, 2048, %s589, [#allocation4], 128, 128, 8
        $region56: #{tpu_custom_call.1} parent=35 // pred_fallthru
          _
        // Predicated region
        $region57: #{tpu_custom_call.1} parent=35 // pred_check
          %p595 = pneg %p125
        $region58: #{tpu_custom_call.1} parent=35 // pred_check_branch
          %597 = sbr.rel (%p595) target = $region60
        $region59: #{tpu_custom_call.1} parent=35 // pred_region
          %599 = dma.done [#allocation4], 2048
        $region60: #{tpu_custom_call.1} parent=35 // pred_fallthru
          _
      $region36: #{tpu_custom_call.1} parent=5 // pred_fallthru
        _
      %p600 = scmp.le.s32.totalorder 2, %s13
      // Predicated region
      $region61: #{tpu_custom_call.1} parent=5 // pred_check
        %p601 = pneg %p600
      $region62: #{tpu_custom_call.1} parent=5 // pred_check_branch
        %603 = sbr.rel (%p601) target = $region64
      $region63: #{tpu_custom_call.1} parent=5 // pred_region
        %s604 = ssub.s32 %s13, 2
      $region64: #{tpu_custom_call.1} parent=5 // pred_fallthru
        _
    $region6: #{tpu_custom_call.1} parent=1 // loop_footer
      %s17 = sadd.s32 1, %s13
    $region7: #{tpu_custom_call.1} parent=1 // loop_footer_branch
      %12 = sbr.rel target = $region3
    $region8: #{tpu_custom_call.1} parent=1 // loop_exit
      _
    %605 = vsyncpa [#allocation3], 1
    %s606 = scalar_lea.sflag [#allocation3], 1
    %607 = vsyncpa %s606, 1
    %608 = vsyncpa [#allocation6], 1
    %609 = vsyncpa [#allocation4], 1
    %s610 = scalar_lea.sflag [#allocation4], 1
    %611 = vsyncpa %s610, 1

</llo_original>
